<compile_context>
chip_gen: v7x
topology: tpu7x:2x2x1
jax: 0.10.0
libtpu: 0.0.40
codegen_flags: <defaults>
</compile_context>

<pallas_src>
import functools
import math

import jax
import jax.numpy as jnp
from jax.experimental import pallas as pl
from jax.experimental.pallas import tpu as pltpu

# Finite padding sentinel: ||pad - r||^2 ~ 1e34 per dim, so exp(neg_coef * sq) underflows
# to exactly 0.0 for any realistic h/d without ever producing inf/NaN in the arithmetic.
_PAD_VALUE = 1e17


def _round_up(x, m):
    return ((x + m - 1) // m) * m


def _default_num_splits():
    # v7x has 2 TensorCores per chip; v5e/v6e have 1 (a 2-way "parallel" axis there is
    # just a serial outer loop + duplicated epilogue, so keep it at 1).
    try:
        kind = jax.devices()[0].device_kind.lower()
        if "v7" in kind or "7x" in kind:
            return 2
    except Exception:
        pass
    return 1


def _kde_kernel(xt_ref, r_ref, o_ref, acc_ref, *, neg_coef, scale):
    """One grid step: accumulate exp(-2/h^2 * ||x_i - r||^2) for one dense tile of samples."""
    k = pl.program_id(1)  # reduction step within this split ("arbitrary" axis)

    @pl.when(k == 0)
    def _():
        acc_ref[...] = jnp.zeros_like(acc_ref)

    diff = xt_ref[...] - r_ref[...]            # (d, 8, tile/8) - (d, 1, 1)
    sq = jnp.sum(diff * diff, axis=0)          # (8, tile/8); leading-axis reduce = VPU adds only
    acc_ref[...] += jnp.exp(neg_coef * sq)     # padded samples contribute exactly 0

    @pl.when(k == pl.num_programs(1) - 1)
    def _():
        # Single cross-lane/sublane reduce + normalization + store per split.
        o_ref[...] = jnp.sum(acc_ref[...], keepdims=True) * scale


def gaussian_kde_forward(r, X, h, *, tile_n=None, num_splits=None):
    """
    r: (d,) float32 query point
    X: (N, d) float32 samples
    h: float smoothing parameter
    returns: (1,) float32 -- estimated density at r (matches the torch module's output shape)
    """
    N, d = X.shape
    X = X.astype(jnp.float32)
    r3 = r.astype(jnp.float32).reshape(d, 1, 1)

    if num_splits is None:
        num_splits = _default_num_splits()
    num_splits = int(num_splits)

    # ---- Tile sizing: ~2 MiB of X per grid step so DMA dominates the fixed step cost. ----
    if tile_n is None:
        tile_n = (2 << 20) // (4 * d)
    # tile must be a multiple of 8*128 = 1024 so (8, tile/8) blocks satisfy (8,128) tiling.
    tile = _round_up(max(int(tile_n), 1024), 1024)
    per_split = pl.cdiv(N, num_splits)
    tile = min(tile, _round_up(per_split, 1024))
    # VMEM safety cap: 2x double-buffered X tiles + accumulator must stay well under the
    # 32 MiB default scoped limit (v7x physical VMEM is only 64 MiB).
    max_tile = max(1024, (((24 << 20) // ((2 * d + 1) * 4)) // 1024) * 1024)
    tile = min(tile, max_tile)

    inner = pl.cdiv(N, num_splits * tile)      # reduction steps per split
    n_pad = num_splits * inner * tile

    # ---- Layout: sublane/lane-dense (d, 8, n_pad/8); sentinel tail -> exp underflows to 0. ----
    # TODO(synk): if X is reused across many query points, build (and cache) this layout once
    # outside the per-query call; the transpose/pad below is the only wrapper-side copy.
    Xt = X.T                                                   # (d, N)
    if n_pad != N:
        Xt = jnp.pad(Xt, ((0, 0), (0, n_pad - N)), constant_values=_PAD_VALUE)
    Xt = Xt.reshape(d, 8, n_pad // 8)                          # contiguous view of (d, n_pad)

    neg_coef = -2.0 / (float(h) ** 2)
    # 2/pi folded into the final normalization constant (uses the true N, not the padded one).
    # TODO(synk): for extreme h/d this Python-float constant can under/overflow; compute in
    # log space if that regime matters.
    scale = 2.0 / (math.pi * N * (float(h) ** d))

    kernel = functools.partial(_kde_kernel, neg_coef=neg_coef, scale=scale)

    out = pl.pallas_call(
        kernel,
        out_shape=jax.ShapeDtypeStruct((num_splits, 1, 1), jnp.float32),
        grid_spec=pltpu.PrefetchScalarGridSpec(
            num_scalar_prefetch=0,
            grid=(num_splits, inner),
            in_specs=[
                # X tile: (d, 8, tile/8) -- samples fill full (8,128) vregs.
                pl.BlockSpec((d, 8, tile // 8), lambda s, k: (0, 0, s * inner + k)),
                # r column: same (d, 1, 1) block every step.
                pl.BlockSpec((d, 1, 1), lambda s, k: (0, 0, 0)),
            ],
            # One (1, 1) partial density per split; leading dim squeezed in-kernel.
            out_specs=pl.BlockSpec((None, 1, 1), lambda s, k: (s, 0, 0)),
            scratch_shapes=[pltpu.VMEM((8, tile // 8), jnp.float32)],
        ),
        compiler_params=pltpu.CompilerParams(
            dimension_semantics=("parallel", "arbitrary"),
        ),
        cost_estimate=pl.CostEstimate(
            flops=int(n_pad) * (3 * d + 2),
            transcendentals=int(n_pad),
            bytes_accessed=4 * (d * int(n_pad) + d + num_splits),
        ),
    )(Xt, r3)

    # Sum the per-core partial densities (each already normalized).
    return jnp.sum(out).reshape(1)


def _reference(r, X, h):
    N, d = X.shape
    dist = jnp.sqrt(jnp.sum((X - r[None, :]) ** 2, axis=-1, keepdims=True))  # (N, 1)
    K = jnp.exp(-2.0 / h ** 2 * dist ** 2) * 2.0 / jnp.pi
    return 1.0 / (N * h ** d) * jnp.sum(K, axis=0)


def _check(r, X, h, **kw):
    f_hat = jax.block_until_ready(gaussian_kde_forward(r, X, h, **kw))
    ref = _reference(r, X, h)
    assert f_hat.shape == (1,), f_hat.shape
    assert jnp.allclose(f_hat, ref, rtol=3e-5, atol=1e-7), (f_hat, ref)


if __name__ == "__main__":
    key = jax.random.PRNGKey(0)
    k1, k2, k3 = jax.random.split(key, 3)

    d = 8
    h = 1.0
    # Moderate spread so densities are O(1e-2) and the comparison is numerically meaningful.
    X = 0.3 * jax.random.normal(k1, (256, d), dtype=jnp.float32)
    r = 0.3 * jax.random.normal(k2, (d,), dtype=jnp.float32)

    # 1) Small N: single tile per split, padded tail zeroed via the sentinel (no mask).
    _check(r, X, h)

    # 2) Larger ragged N with an explicit small tile -> multi-step accumulation along the
    #    "arbitrary" reduction axis plus padding.
    X_big = 0.3 * jax.random.normal(k3, (5000, d), dtype=jnp.float32)
    _check(r, X_big, h, tile_n=1024)

    # 3) Explicit 2-way split (exercises the "parallel" axis path on any chip; shards
    #    across TensorCores on v7x).
    _check(r, X_big, h, tile_n=1024, num_splits=2)

    print("KERNEL_OK")
</pallas_src>

<mosaic_0001>
module attributes {stable_mosaic.version = 11 : i64} {
  func.func @_kde_kernel(%arg0: i32, %arg1: i32, %arg2: memref<8x8x128xf32, #tpu.memory_space<vmem>>, %arg3: memref<8x1x1xf32, #tpu.memory_space<vmem>>, %arg4: memref<1x1x1xf32, #tpu.memory_space<vmem>>, %arg5: memref<8x128xf32, #tpu.memory_space<vmem>>) attributes {dimension_semantics = [#tpu.dimension_semantics<parallel>, #tpu.dimension_semantics<arbitrary>], iteration_bounds = array<i64: 1, 1>, scalar_prefetch = 0 : i64, scratch_operands = 1 : i64, tpu.core_type = #tpu.core_type<tc>, window_params = [{transform_indices = @transform_0, window_bounds = array<i64: 8, 8, 128>}, {pipeline_mode = #tpu.pipeline_mode<synchronous>, transform_indices = @transform_1, window_bounds = array<i64: 8, 1, 1>}, {transform_indices = @transform_2, window_bounds = array<i64: 1, 1, 1>}]} {
    %c0_i32 = arith.constant 0 : i32
    %0 = arith.cmpi eq, %arg1, %c0_i32 : i32
    %1 = arith.extui %0 : i1 to i32
    %c0_i32_0 = arith.constant 0 : i32
    %2 = arith.cmpi ne, %1, %c0_i32_0 : i32
    scf.if %2 {
      %cst_13 = arith.constant 0.000000e+00 : f32
      %18 = vector.broadcast %cst_13 : f32 to vector<8x128xf32>
      %c0_14 = arith.constant 0 : index
      %c0_15 = arith.constant 0 : index
      %19 = vector.load %arg5[%c0_14, %c0_15] : memref<8x128xf32, #tpu.memory_space<vmem>>, vector<8x128xf32>
      tpu.vector_store %arg5[%c0_14, %c0_15], %18 {strides = array<i32>} : memref<8x128xf32, #tpu.memory_space<vmem>>, vector<8x128xf32>,
    } else {
    }
    %c0 = arith.constant 0 : index
    %c0_1 = arith.constant 0 : index
    %c0_2 = arith.constant 0 : index
    %3 = vector.load %arg2[%c0, %c0_1, %c0_2] : memref<8x8x128xf32, #tpu.memory_space<vmem>>, vector<8x8x128xf32>
    %c0_3 = arith.constant 0 : index
    %c0_4 = arith.constant 0 : index
    %c0_5 = arith.constant 0 : index
    %4 = vector.load %arg3[%c0_3, %c0_4, %c0_5] : memref<8x1x1xf32, #tpu.memory_space<vmem>>, vector<8x1x1xf32>
    %5 = vector.broadcast %4 : vector<8x1x1xf32> to vector<8x8x128xf32>
    %6 = arith.subf %3, %5 : vector<8x8x128xf32>
    %7 = arith.mulf %6, %6 : vector<8x8x128xf32>
    %cst = arith.constant dense<0.000000e+00> : vector<8x128xf32>
    %8 = vector.multi_reduction <add>, %7, %cst [0] : vector<8x8x128xf32> to vector<8x128xf32>
    %c0_6 = arith.constant 0 : index
    %c0_7 = arith.constant 0 : index
    %9 = vector.load %arg5[%c0_6, %c0_7] : memref<8x128xf32, #tpu.memory_space<vmem>>, vector<8x128xf32>
    %cst_8 = arith.constant -2.000000e+00 : f32
    %10 = vector.broadcast %cst_8 : f32 to vector<8x128xf32>
    %11 = arith.mulf %10, %8 : vector<8x128xf32>
    %12 = math.exp %11 : vector<8x128xf32>
    %13 = arith.addf %9, %12 : vector<8x128xf32>
    %c0_9 = arith.constant 0 : index
    %c0_10 = arith.constant 0 : index
    %14 = vector.load %arg5[%c0_9, %c0_10] : memref<8x128xf32, #tpu.memory_space<vmem>>, vector<8x128xf32>
    tpu.vector_store %arg5[%c0_9, %c0_10], %13 {strides = array<i32>} : memref<8x128xf32, #tpu.memory_space<vmem>>, vector<8x128xf32>,
    %c0_i32_11 = arith.constant 0 : i32
    %15 = arith.cmpi eq, %arg1, %c0_i32_11 : i32
    %16 = arith.extui %15 : i1 to i32
    %c0_i32_12 = arith.constant 0 : i32
    %17 = arith.cmpi ne, %16, %c0_i32_12 : i32
    scf.if %17 {
      %c0_13 = arith.constant 0 : index
      %c0_14 = arith.constant 0 : index
      %18 = vector.load %arg5[%c0_13, %c0_14] : memref<8x128xf32, #tpu.memory_space<vmem>>, vector<8x128xf32>
      %19 = vector.shape_cast %18 : vector<8x128xf32> to vector<1x8x128xf32>
      %cst_15 = arith.constant dense<0.000000e+00> : vector<1xf32>
      %20 = vector.multi_reduction <add>, %19, %cst_15 [1, 2] : vector<1x8x128xf32> to vector<1xf32>
      %21 = vector.shape_cast %20 : vector<1xf32> to vector<1x1x1xf32>
      %22 = vector.extract %21[0, 0, 0] : f32 from vector<1x1x1xf32>
      %23 = vector.broadcast %22 : f32 to vector<1x1xf32>
      %cst_16 = arith.constant 0.00248679589 : f32
      %24 = vector.broadcast %cst_16 : f32 to vector<1x1xf32>
      %25 = arith.mulf %23, %24 : vector<1x1xf32>
      %c0_17 = arith.constant 0 : index
      %c0_18 = arith.constant 0 : index
      %c0_19 = arith.constant 0 : index
      %26 = vector.load %arg4[%c0_17, %c0_18, %c0_19] : memref<1x1x1xf32, #tpu.memory_space<vmem>>, vector<1x1x1xf32>
      %27 = vector.shape_cast %26 : vector<1x1x1xf32> to vector<1x1xf32>
      %28 = vector.shape_cast %25 : vector<1x1xf32> to vector<1x1x1xf32>
      tpu.vector_store %arg4[%c0_17, %c0_18, %c0_19], %28 {strides = array<i32>} : memref<1x1x1xf32, #tpu.memory_space<vmem>>, vector<1x1x1xf32>,
    } else {
    }
    return
  }
  func.func @transform_0(%arg0: i32, %arg1: i32) -> (i32, i32, i32) {
    %c1_i32 = arith.constant 1 : i32
    %0 = arith.muli %arg0, %c1_i32 : i32
    %1 = arith.addi %0, %arg1 : i32
    %c0_i32 = arith.constant 0 : i32
    %c0_i32_0 = arith.constant 0 : i32
    %c0_i32_1 = arith.constant 0 : i32
    return %c0_i32, %c0_i32_0, %1 : i32, i32, i32
  }
  func.func @transform_1(%arg0: i32, %arg1: i32) -> (i32, i32, i32) {
    %c0_i32 = arith.constant 0 : i32
    %c0_i32_0 = arith.constant 0 : i32
    %c0_i32_1 = arith.constant 0 : i32
    %c0_i32_2 = arith.constant 0 : i32
    return %c0_i32, %c0_i32_0, %c0_i32_1 : i32, i32, i32
  }
  func.func @transform_2(%arg0: i32, %arg1: i32) -> (i32, i32, i32) {
    %c0_i32 = arith.constant 0 : i32
    %c0_i32_0 = arith.constant 0 : i32
    %c0_i32_1 = arith.constant 0 : i32
    return %arg0, %c0_i32, %c0_i32_0 : i32, i32, i32
  }
}

</mosaic_0001>

<llo_original>
// kernel: tpu_custom_call.1
$region0: #{tpu_custom_call.1}
  #allocation0 [shape = 'u32[]', space=smem, size = 0x4, offset = 0x4, fixed_abs, tag = 'smem constant byte address 0x4 - core index']
  #allocation1 [shape = 'u32[144,128]{1,0:T(1,128)}', space=vmem, size = 0x12000, scoped, tag = 'internal scratch']
  #allocation2 [shape = 'f32[8,128]{1,0:T(8,128)}', space=vmem, size = 0x1000, scoped, tag = 'scratch operand']
  %s0 = inlined_call_operand.hbm [shape: f32[8,8,128], index: 0, kind: input, shape index: {}]
  %s1 = inlined_call_operand.vmem [shape: f32[8,1,1], index: 1, kind: input, shape index: {}]
  %s2 = inlined_call_operand.hbm [shape: f32[1,1,1], index: 2, kind: output, shape index: {}]
  %s3 = sld [smem:[#allocation0]]
  $region30: #{tpu_custom_call.1} parent=0
    _
  %s5 = ssub.s32 1, %s3
  %s6 = scalar_select 0, %s5, %s3
  $region1: #{tpu_custom_call.1} parent=0
    #allocation3 [shape = 'u8[32768]{0}', space=vmem, size = 0x8000, scoped, tag = 'input window, operand 0, single buffered']
    #allocation4 [shape = 's32[1]{0}', space=sflag, size = 0x4, scoped, tag = 'scoped memory for tpu_custom_call.1']
    #allocation5 [shape = 's32[1]{0}', space=sflag, size = 0x4, scoped, tag = 'scoped memory for tpu_custom_call.1']
    #allocation6 [shape = 'u8[512]{0}', space=vmem, size = 0x400, scoped, tag = 'output window, operand 0, single buffered']
    %7 = vsyncpa [#allocation4], 0
    %8 = vsyncpa [#allocation5], 0
    // Predicated region
    $region2: #{tpu_custom_call.1} parent=1 // pred_check
      _
    $region3: #{tpu_custom_call.1} parent=1 // pred_check_branch
      %10 = sbr.rel (0) target = $region5
    $region4: #{tpu_custom_call.1} parent=1 // pred_region
      %s11 = sadd.s32 0, 0
      %s13 = ssub.s32 1024, 1024
      %14 = vsyncadd [#allocation4], %s13
      %s15 = smul.addr %s11, 128
      %s16 = scalar_lea.hbm %s0, %s15
      %s17 = sshll.u32 [#allocation3], 4
      %s18 = int_to_ptr.vmem [resolvable:$true] %s17
      %23 = dma.hbm_to_vmem [thread:$0]  %s16, 1024, %s18, [#allocation4], 128, 128, 8
    $region5: #{tpu_custom_call.1} parent=1 // pred_fallthru
      _
    // Predicated region
    $region6: #{tpu_custom_call.1} parent=1 // pred_check
      _
    $region7: #{tpu_custom_call.1} parent=1 // pred_check_branch
      %25 = sbr.rel (0) target = $region9
    $region8: #{tpu_custom_call.1} parent=1 // pred_region
      _
    $region9: #{tpu_custom_call.1} parent=1 // pred_fallthru
      _
    // Predicated region
    $region10: #{tpu_custom_call.1} parent=1 // pred_check
      _
    $region11: #{tpu_custom_call.1} parent=1 // pred_check_branch
      %27 = sbr.rel (0) target = $region13
    $region12: #{tpu_custom_call.1} parent=1 // pred_region
      %28 = dma.done [#allocation4], 1024
    $region13: #{tpu_custom_call.1} parent=1 // pred_fallthru
      _
    %s29 = sadd.s32 0, 0
    %p30 = scmp.eq.s32.totalorder 0, 0
    // Predicated region
    $region14: #{tpu_custom_call.1} parent=1 // pred_check
      %p31 = pneg %p30
    $region15: #{tpu_custom_call.1} parent=1 // pred_check_branch
      %33 = sbr.rel (%p31) target = $region17
    $region16: #{tpu_custom_call.1} parent=1 // pred_region
      %34 = vst [vmem:[#allocation2] sm:$0xff] 0.0
    $region17: #{tpu_custom_call.1} parent=1 // pred_fallthru
      _
    %v35 = vld [vmem:[#allocation3] sm:$0xff]
    %v36 = vld [vmem:[#allocation3 + $0x8] sm:$0xff]
    %v37 = vld [vmem:[#allocation3 + $0x10] sm:$0xff]
    %v38 = vld [vmem:[#allocation3 + $0x18] sm:$0xff]
    %v39 = vld [vmem:[#allocation3 + $0x20] sm:$0xff]
    %v40 = vld [vmem:[#allocation3 + $0x28] sm:$0xff]
    %v41 = vld [vmem:[#allocation3 + $0x30] sm:$0xff]
    %v42 = vld [vmem:[#allocation3 + $0x38] sm:$0xff]
    %v43 = vld [vmem:[%s1] sm:$0x1]
    %v44 = vld [vmem:[%s1 + $0x1] sm:$0x1]
    %v45 = vld [vmem:[%s1 + $0x2] sm:$0x1]
    %v46 = vld [vmem:[%s1 + $0x3] sm:$0x1]
    %v47 = vld [vmem:[%s1 + $0x4] sm:$0x1]
    %v48 = vld [vmem:[%s1 + $0x5] sm:$0x1]
    %v49 = vld [vmem:[%s1 + $0x6] sm:$0x1]
    %v50 = vld [vmem:[%s1 + $0x7] sm:$0x1]
    %v59 = vlaneseq
    %v60 = vshrl.u32 %v59, 7
    %v61 = vsub.s32 0, %v60
    %v62 = vrot.slane %v43, %v61
    %v63 = vlaneseq
    %v64 = vshrl.u32 %v63, 7
    %v65 = vsub.s32 0, %v64
    %v66 = vrot.slane %v44, %v65
    %v67 = vlaneseq
    %v68 = vshrl.u32 %v67, 7
    %v69 = vsub.s32 0, %v68
    %v70 = vrot.slane %v45, %v69
    %v71 = vlaneseq
    %v72 = vshrl.u32 %v71, 7
    %v73 = vsub.s32 0, %v72
    %v74 = vrot.slane %v46, %v73
    %v75 = vlaneseq
    %v76 = vshrl.u32 %v75, 7
    %v77 = vsub.s32 0, %v76
    %v78 = vrot.slane %v47, %v77
    %v79 = vlaneseq
    %v80 = vshrl.u32 %v79, 7
    %v81 = vsub.s32 0, %v80
    %v82 = vrot.slane %v48, %v81
    %v83 = vlaneseq
    %v84 = vshrl.u32 %v83, 7
    %v85 = vsub.s32 0, %v84
    %v86 = vrot.slane %v49, %v85
    %v87 = vlaneseq
    %v88 = vshrl.u32 %v87, 7
    %v89 = vsub.s32 0, %v88
    %v90 = vrot.slane %v50, %v89
    %91 = vset.pattern.permute.xlu0 0
    %92 = vperm.xlu0 %91, %v62
    %v93 = vpop.permute.xlu0 %92
    %95 = vset.pattern.permute.xlu0 0
    %96 = vperm.xlu0 %95, %v66
    %v97 = vpop.permute.xlu0 %96
    %99 = vset.pattern.permute.xlu0 0
    %100 = vperm.xlu0 %99, %v70
    %v101 = vpop.permute.xlu0 %100
    %103 = vset.pattern.permute.xlu0 0
    %104 = vperm.xlu0 %103, %v74
    %v105 = vpop.permute.xlu0 %104
    %107 = vset.pattern.permute.xlu0 0
    %108 = vperm.xlu0 %107, %v78
    %v109 = vpop.permute.xlu0 %108
    %111 = vset.pattern.permute.xlu0 0
    %112 = vperm.xlu0 %111, %v82
    %v113 = vpop.permute.xlu0 %112
    %115 = vset.pattern.permute.xlu0 0
    %116 = vperm.xlu0 %115, %v86
    %v117 = vpop.permute.xlu0 %116
    %119 = vset.pattern.permute.xlu0 0
    %120 = vperm.xlu0 %119, %v90
    %v121 = vpop.permute.xlu0 %120
    %v123 = vsub.f32 %v35, %v93
    %v124 = vsub.f32 %v36, %v97
    %v125 = vsub.f32 %v37, %v101
    %v126 = vsub.f32 %v38, %v105
    %v127 = vsub.f32 %v39, %v109
    %v128 = vsub.f32 %v40, %v113
    %v129 = vsub.f32 %v41, %v117
    %v130 = vsub.f32 %v42, %v121
    %v131 = vmul.f32 %v123, %v123
    %v132 = vmul.f32 %v124, %v124
    %v133 = vmul.f32 %v125, %v125
    %v134 = vmul.f32 %v126, %v126
    %v135 = vmul.f32 %v127, %v127
    %v136 = vmul.f32 %v128, %v128
    %v137 = vmul.f32 %v129, %v129
    %v138 = vmul.f32 %v130, %v130
    %v139 = vadd.f32 %v131, %v132
    %v140 = vadd.f32 %v139, %v133
    %v141 = vadd.f32 %v140, %v134
    %v142 = vadd.f32 %v141, %v135
    %v143 = vadd.f32 %v142, %v136
    %v144 = vadd.f32 %v143, %v137
    %v145 = vadd.f32 %v144, %v138
    %v146 = vld [vmem:[#allocation2] sm:$0xff]
    %v147 = vmul.f32 %v145, -2.0
    %v148 = vmul.f32 %v147, 1.442695
    %v149 = vpow.pop %v148
    %v150 = vadd.f32 %v146, %v149
    %151 = vst [vmem:[#allocation2] sm:$0xff] %v150
    // Predicated region
    $region18: #{tpu_custom_call.1} parent=1 // pred_check
      %p152 = pneg %p30
    $region19: #{tpu_custom_call.1} parent=1 // pred_check_branch
      %154 = sbr.rel (%p152) target = $region21
    $region20: #{tpu_custom_call.1} parent=1 // pred_region
      %v155 = vld [vmem:[#allocation2] sm:$0xff]
      %156 = vadd.xlane.f32.xlu0 %v155
      %v157 = vpop.xlane.xlu0 %156
      %v158 = vrot.slane %v157, 4
      %v159 = vadd.f32 %v157, %v158
      %v160 = vrot.slane %v159, 2
      %v161 = vadd.f32 %v159, %v160
      %v162 = vrot.slane %v161, 1
      %v163 = vadd.f32 %v161, %v162
      %s164 = vtos %v163
      %v165 = vstv %s164
      %v166 = vmul.f32 %v165, 0.002486796
      %vm167 = vcmask 0
      %168 = vst.msk [vmem:[#allocation6] sm:$0x1] %vm167, %v166
    $region21: #{tpu_custom_call.1} parent=1 // pred_fallthru
      _
    // Predicated region
    $region22: #{tpu_custom_call.1} parent=1 // pred_check
      _
    $region23: #{tpu_custom_call.1} parent=1 // pred_check_branch
      %170 = sbr.rel (0) target = $region25
    $region24: #{tpu_custom_call.1} parent=1 // pred_region
      %s172 = ssub.s32 16, 16
      %173 = vsyncadd [#allocation5], %s172
      %s175 = sshll.u32 [#allocation6], 4
      %s176 = int_to_ptr.vmem [resolvable:$true] %s175
      %178 = dma.vmem_to_hbm [thread:$0]  %s176, 16, %s2, [#allocation5]
    $region25: #{tpu_custom_call.1} parent=1 // pred_fallthru
      _
    // Predicated region
    $region26: #{tpu_custom_call.1} parent=1 // pred_check
      _
    $region27: #{tpu_custom_call.1} parent=1 // pred_check_branch
      %180 = sbr.rel (0) target = $region29
    $region28: #{tpu_custom_call.1} parent=1 // pred_region
      %181 = dma.done [#allocation5], 16
    $region29: #{tpu_custom_call.1} parent=1 // pred_fallthru
      _
    %182 = vsyncpa [#allocation4], 1
    %183 = vsyncpa [#allocation5], 1

</llo_original>
